<compile_context>
chip_gen: v7x
topology: tpu7x:2x2x1
jax: 0.10.0
libtpu: 0.0.40
codegen_flags: <defaults>
</compile_context>

<pallas_src>
import jax
import jax.numpy as jnp
from jax.experimental import pallas as pl
from jax.experimental.pallas import tpu as pltpu


def _round_up(x, m):
    return ((x + m - 1) // m) * m


# ----------------------------------------------------------------------------
# Kernel: fused y = relu(x @ w + b) for one (TM, TN) output tile
# ----------------------------------------------------------------------------
def project_head_kernel(x_ref, w_ref, b_ref, o_ref):
    y = jnp.dot(x_ref[...], w_ref[...], preferred_element_type=jnp.float32)
    o_ref[...] = jnp.maximum(y + b_ref[...], 0.0).astype(o_ref.dtype)


# ----------------------------------------------------------------------------
# Wrapper
# ----------------------------------------------------------------------------
def project_head_forward(params, x, *, tm=256, tn=512):
    """relu(x @ W + b).  W is stored (input_dim, hidden_dim), i.e. already
    transposed relative to PyTorch nn.Linear's (out, in) weight layout."""
    w, b = params["w_fc0"], params["b_fc0"]
    in_dim, hid_dim = w.shape

    lead = x.shape[:-1]
    m = 1
    for d in lead:
        m *= d
    x2 = x.reshape(m, in_dim).astype(jnp.float32)

    # Tile sizes: sublane-aligned M tiles, lane-dense (128-multiple) N tiles.
    tm = min(tm, _round_up(m, 8))
    tn = min(tn, _round_up(hid_dim, 128))
    m_pad = _round_up(m, tm)
    n_pad = _round_up(hid_dim, tn)

    if m_pad != m:
        x2 = jnp.pad(x2, ((0, m_pad - m), (0, 0)))
    w_p = jnp.pad(w, ((0, 0), (0, n_pad - hid_dim))) if n_pad != hid_dim else w
    b_p = jnp.pad(b, ((0, 0), (0, n_pad - hid_dim))) if n_pad != hid_dim else b

    grid = (m_pad // tm, n_pad // tn)
    out = pl.pallas_call(
        project_head_kernel,
        out_shape=jax.ShapeDtypeStruct((m_pad, n_pad), jnp.float32),
        grid=grid,
        in_specs=[
            pl.BlockSpec((tm, in_dim), lambda i, j: (i, 0)),   # activations
            pl.BlockSpec((in_dim, tn), lambda i, j: (0, j)),   # weight
            pl.BlockSpec((1, tn), lambda i, j: (0, j)),        # bias
        ],
        out_specs=pl.BlockSpec((tm, tn), lambda i, j: (i, j)),
        compiler_params=pltpu.CompilerParams(
            dimension_semantics=("parallel", "parallel"),
            vmem_limit_bytes=64 << 20,
        ),
    )(x2, w_p, b_p)

    out = out[:m, :hid_dim]
    return out.reshape(*lead, hid_dim)


# ----------------------------------------------------------------------------
# Deterministic parameter init (matches nn.Linear default: U(-1/sqrt(in), ...))
# ----------------------------------------------------------------------------
def init_params(key, input_dim, hidden_dim):
    kw, kb = jax.random.split(key)
    bound = 1.0 / jnp.sqrt(jnp.float32(input_dim))
    return {
        "w_fc0": jax.random.uniform(kw, (input_dim, hidden_dim), jnp.float32,
                                    -bound, bound),
        "b_fc0": jax.random.uniform(kb, (1, hidden_dim), jnp.float32,
                                    -bound, bound),
    }


if __name__ == "__main__":
    # Small shapes consistent with ProjectHead's use in CnnRnn:
    # x = per-patch CNN features (batch, num_patch, feat_dim) -> embed_dim.
    bs, num_patch = 2, 8
    input_dim, hidden_dim = 256, 128

    key = jax.random.PRNGKey(0)
    k_x, k_p = jax.random.split(key)
    x = jax.random.normal(k_x, (bs, num_patch, input_dim), jnp.float32)
    params = init_params(k_p, input_dim, hidden_dim)

    out = jax.jit(project_head_forward)(params, x)
    out = jax.block_until_ready(out)

    assert out.shape == (bs, num_patch, hidden_dim), out.shape

    # Reference check (plain XLA)
    ref = jnp.maximum(
        x.reshape(-1, input_dim) @ params["w_fc0"] + params["b_fc0"], 0.0
    ).reshape(bs, num_patch, hidden_dim)
    assert bool(jnp.allclose(out, ref, atol=1e-2, rtol=1e-2)), (
        float(jnp.max(jnp.abs(out - ref))))

    print("KERNEL_OK")
</pallas_src>

<mosaic_0001>
module attributes {stable_mosaic.version = 11 : i64} {
  func.func @project_head_kernel(%arg0: i32, %arg1: i32, %arg2: memref<16x256xf32, #tpu.memory_space<vmem>>, %arg3: memref<256x128xf32, #tpu.memory_space<vmem>>, %arg4: memref<1x128xf32, #tpu.memory_space<vmem>>, %arg5: memref<16x128xf32, #tpu.memory_space<vmem>>) attributes {dimension_semantics = [#tpu.dimension_semantics<parallel>, #tpu.dimension_semantics<parallel>], iteration_bounds = array<i64: 1, 1>, scalar_prefetch = 0 : i64, scratch_operands = 0 : i64, tpu.core_type = #tpu.core_type<tc>, window_params = [{transform_indices = @transform_0, window_bounds = array<i64: 16, 256>}, {transform_indices = @transform_1, window_bounds = array<i64: 256, 128>}, {transform_indices = @transform_2, window_bounds = array<i64: 1, 128>}, {transform_indices = @transform_3, window_bounds = array<i64: 16, 128>}]} {
    %c0 = arith.constant 0 : index
    %c0_0 = arith.constant 0 : index
    %0 = vector.load %arg2[%c0, %c0_0] : memref<16x256xf32, #tpu.memory_space<vmem>>, vector<16x256xf32>
    %c0_1 = arith.constant 0 : index
    %c0_2 = arith.constant 0 : index
    %1 = vector.load %arg3[%c0_1, %c0_2] : memref<256x128xf32, #tpu.memory_space<vmem>>, vector<256x128xf32>
    %cst = arith.constant dense<0.000000e+00> : vector<16x128xf32>
    %2 = tpu.matmul %0, %1, %cst {dimension_numbers = #tpu.dot_dimension_numbers<[1], [0], [0], [1], [0, 0, 1, 1], [], []>} : vector<16x256xf32>, vector<256x128xf32>, vector<16x128xf32> -> vector<16x128xf32>
    %c0_3 = arith.constant 0 : index
    %c0_4 = arith.constant 0 : index
    %3 = vector.load %arg4[%c0_3, %c0_4] : memref<1x128xf32, #tpu.memory_space<vmem>>, vector<1x128xf32>
    %4 = vector.broadcast %3 : vector<1x128xf32> to vector<16x128xf32>
    %5 = arith.addf %2, %4 : vector<16x128xf32>
    %cst_5 = arith.constant 0.000000e+00 : f32
    %6 = vector.broadcast %cst_5 : f32 to vector<16x128xf32>
    %7 = arith.maximumf %5, %6 : vector<16x128xf32>
    %c0_6 = arith.constant 0 : index
    %c0_7 = arith.constant 0 : index
    %8 = vector.load %arg5[%c0_6, %c0_7] : memref<16x128xf32, #tpu.memory_space<vmem>>, vector<16x128xf32>
    tpu.vector_store %arg5[%c0_6, %c0_7], %7 {strides = array<i32>} : memref<16x128xf32, #tpu.memory_space<vmem>>, vector<16x128xf32>,
    return
  }
  func.func @transform_0(%arg0: i32, %arg1: i32) -> (i32, i32) {
    %c0_i32 = arith.constant 0 : i32
    %c0_i32_0 = arith.constant 0 : i32
    return %arg0, %c0_i32 : i32, i32
  }
  func.func @transform_1(%arg0: i32, %arg1: i32) -> (i32, i32) {
    %c0_i32 = arith.constant 0 : i32
    %c0_i32_0 = arith.constant 0 : i32
    return %c0_i32, %arg1 : i32, i32
  }
  func.func @transform_2(%arg0: i32, %arg1: i32) -> (i32, i32) {
    %c0_i32 = arith.constant 0 : i32
    %c0_i32_0 = arith.constant 0 : i32
    return %c0_i32, %arg1 : i32, i32
  }
  func.func @transform_3(%arg0: i32, %arg1: i32) -> (i32, i32) {
    %c0_i32 = arith.constant 0 : i32
    return %arg0, %arg1 : i32, i32
  }
}

</mosaic_0001>

<llo_original>
// kernel: project_head_forward.1
$region0: #{project_head_forward.1}
  #allocation0 [shape = 'u32[]', space=smem, size = 0x4, offset = 0x4, fixed_abs, tag = 'smem constant byte address 0x4 - core index']
  #allocation1 [shape = 'u32[144,128]{1,0:T(1,128)}', space=vmem, size = 0x12000, scoped, tag = 'internal scratch']
  %s0 = inlined_call_operand.hbm [shape: f32[16,256], index: 0, kind: input, shape index: {}]
  %s1 = inlined_call_operand.hbm [shape: f32[256,128], index: 1, kind: input, shape index: {}]
  %s2 = inlined_call_operand.hbm [shape: f32[1,128], index: 2, kind: input, shape index: {}]
  %s3 = inlined_call_operand.hbm [shape: f32[16,128], index: 3, kind: output, shape index: {}]
  %s4 = sld [smem:[#allocation0]]
  $region34: #{project_head_forward.1} parent=0
    _
  %s6 = ssub.s32 1, %s4
  %s7 = scalar_select 0, %s6, %s4
  $region1: #{project_head_forward.1} parent=0
    #allocation2 [shape = 'u8[16384]{0}', space=vmem, size = 0x4000, scoped, tag = 'input window, operand 0, single buffered']
    #allocation3 [shape = 's32[1]{0}', space=sflag, size = 0x4, scoped, tag = 'scoped memory for project_head_forward.1']
    #allocation4 [shape = 's32[1]{0}', space=sflag, size = 0x4, scoped, tag = 'scoped memory for project_head_forward.1']
    #allocation5 [shape = 'u8[131072]{0}', space=vmem, size = 0x20000, scoped, tag = 'input window, operand 1, single buffered']
    #allocation6 [shape = 's32[1]{0}', space=sflag, size = 0x4, scoped, tag = 'scoped memory for project_head_forward.1']
    #allocation7 [shape = 'u8[512]{0}', space=vmem, size = 0x400, scoped, tag = 'input window, operand 2, single buffered']
    #allocation8 [shape = 'u8[8192]{0}', space=vmem, size = 0x2000, scoped, tag = 'output window, operand 0, single buffered']
    %8 = vsyncpa [#allocation3], 0
    %9 = vsyncpa [#allocation6], 0
    %10 = vsyncpa [#allocation4], 0
    // Predicated region
    $region2: #{project_head_forward.1} parent=1 // pred_check
      _
    $region3: #{project_head_forward.1} parent=1 // pred_check_branch
      %12 = sbr.rel (0) target = $region5
    $region4: #{project_head_forward.1} parent=1 // pred_region
      %s14 = ssub.s32 512, 512
      %15 = vsyncadd [#allocation3], %s14
      %s16 = sshll.u32 [#allocation2], 4
      %s17 = int_to_ptr.vmem [resolvable:$true] %s16
      %22 = dma.hbm_to_vmem [thread:$0]  %s0, 512, %s17, [#allocation3], 256, 256, 16
    $region5: #{project_head_forward.1} parent=1 // pred_fallthru
      _
    // Predicated region
    $region6: #{project_head_forward.1} parent=1 // pred_check
      _
    $region7: #{project_head_forward.1} parent=1 // pred_check_branch
      %24 = sbr.rel (0) target = $region9
    $region8: #{project_head_forward.1} parent=1 // pred_region
      %s26 = ssub.s32 4096, 4096
      %27 = vsyncadd [#allocation6], %s26
      %s28 = sshll.u32 [#allocation5], 4
      %s29 = int_to_ptr.vmem [resolvable:$true] %s28
      %34 = dma.hbm_to_vmem [thread:$0]  %s1, 4096, %s29, [#allocation6], 128, 128, 8
    $region9: #{project_head_forward.1} parent=1 // pred_fallthru
      _
    // Predicated region
    $region10: #{project_head_forward.1} parent=1 // pred_check
      _
    $region11: #{project_head_forward.1} parent=1 // pred_check_branch
      %36 = sbr.rel (0) target = $region13
    $region12: #{project_head_forward.1} parent=1 // pred_region
      %s38 = ssub.s32 16, 16
      %39 = vsyncadd [#allocation6], %s38
      %s41 = sshll.u32 [#allocation7], 4
      %s42 = int_to_ptr.vmem [resolvable:$true] %s41
      %44 = dma.hbm_to_vmem [thread:$0]  %s2, 16, %s42, [#allocation6]
    $region13: #{project_head_forward.1} parent=1 // pred_fallthru
      _
    // Predicated region
    $region14: #{project_head_forward.1} parent=1 // pred_check
      _
    $region15: #{project_head_forward.1} parent=1 // pred_check_branch
      %46 = sbr.rel (0) target = $region17
    $region16: #{project_head_forward.1} parent=1 // pred_region
      %47 = dma.done [#allocation3], 512
    $region17: #{project_head_forward.1} parent=1 // pred_fallthru
      _
    // Predicated region
    $region18: #{project_head_forward.1} parent=1 // pred_check
      _
    $region19: #{project_head_forward.1} parent=1 // pred_check_branch
      %49 = sbr.rel (0) target = $region21
    $region20: #{project_head_forward.1} parent=1 // pred_region
      %50 = dma.done [#allocation6], 4096
    $region21: #{project_head_forward.1} parent=1 // pred_fallthru
      _
    // Predicated region
    $region22: #{project_head_forward.1} parent=1 // pred_check
      _
    $region23: #{project_head_forward.1} parent=1 // pred_check_branch
      %52 = sbr.rel (0) target = $region25
    $region24: #{project_head_forward.1} parent=1 // pred_region
      %53 = dma.done [#allocation6], 16
    $region25: #{project_head_forward.1} parent=1 // pred_fallthru
      _
    %v54 = vld [vmem:[#allocation2] sm:$0xff]
    %v55 = vld [vmem:[#allocation2 + $0x8] sm:$0xff]
    %v56 = vld [vmem:[#allocation2 + $0x10] sm:$0xff]
    %v57 = vld [vmem:[#allocation2 + $0x18] sm:$0xff]
    %v58 = vld [vmem:[#allocation5] sm:$0xff]
    %v59 = vld [vmem:[#allocation5 + $0x8] sm:$0xff]
    %v60 = vld [vmem:[#allocation5 + $0x10] sm:$0xff]
    %v61 = vld [vmem:[#allocation5 + $0x18] sm:$0xff]
    %v62 = vld [vmem:[#allocation5 + $0x20] sm:$0xff]
    %v63 = vld [vmem:[#allocation5 + $0x28] sm:$0xff]
    %v64 = vld [vmem:[#allocation5 + $0x30] sm:$0xff]
    %v65 = vld [vmem:[#allocation5 + $0x38] sm:$0xff]
    %v66 = vld [vmem:[#allocation5 + $0x40] sm:$0xff]
    %v67 = vld [vmem:[#allocation5 + $0x48] sm:$0xff]
    %v68 = vld [vmem:[#allocation5 + $0x50] sm:$0xff]
    %v69 = vld [vmem:[#allocation5 + $0x58] sm:$0xff]
    %v70 = vld [vmem:[#allocation5 + $0x60] sm:$0xff]
    %v71 = vld [vmem:[#allocation5 + $0x68] sm:$0xff]
    %v72 = vld [vmem:[#allocation5 + $0x70] sm:$0xff]
    %v73 = vld [vmem:[#allocation5 + $0x78] sm:$0xff]
    %v74 = vld [vmem:[#allocation5 + $0x80] sm:$0xff]
    %v75 = vld [vmem:[#allocation5 + $0x88] sm:$0xff]
    %v76 = vld [vmem:[#allocation5 + $0x90] sm:$0xff]
    %v77 = vld [vmem:[#allocation5 + $0x98] sm:$0xff]
    %v78 = vld [vmem:[#allocation5 + $0xa0] sm:$0xff]
    %v79 = vld [vmem:[#allocation5 + $0xa8] sm:$0xff]
    %v80 = vld [vmem:[#allocation5 + $0xb0] sm:$0xff]
    %v81 = vld [vmem:[#allocation5 + $0xb8] sm:$0xff]
    %v82 = vld [vmem:[#allocation5 + $0xc0] sm:$0xff]
    %v83 = vld [vmem:[#allocation5 + $0xc8] sm:$0xff]
    %v84 = vld [vmem:[#allocation5 + $0xd0] sm:$0xff]
    %v85 = vld [vmem:[#allocation5 + $0xd8] sm:$0xff]
    %v86 = vld [vmem:[#allocation5 + $0xe0] sm:$0xff]
    %v87 = vld [vmem:[#allocation5 + $0xe8] sm:$0xff]
    %v88 = vld [vmem:[#allocation5 + $0xf0] sm:$0xff]
    %v89 = vld [vmem:[#allocation5 + $0xf8] sm:$0xff]
    %v90 = vld [vmem:[#allocation7] sm:$0x1]
    %v92 = vlaneseq
    %v93 = vshrl.u32 %v92, 7
    %v94 = vsub.s32 0, %v93
    %v95 = vrot.slane %v90, %v94
    %97 = vmatprep.subr.mxu0 0.0
    %98 = vmatpush1.msra.mxu0 %v58
    %99 = vmatprep.subr.mxu0 0.0
    %100 = vmatpush1.msra.mxu0 %v59
    %101 = vmatprep.subr.mxu0 0.0
    %102 = vmatpush1.msra.mxu0 %v60
    %103 = vmatprep.subr.mxu0 0.0
    %104 = vmatpush1.msra.mxu0 %v61
    %105 = vmatprep.subr.mxu0 0.0
    %106 = vmatpush1.msra.mxu0 %v62
    %107 = vmatprep.subr.mxu0 0.0
    %108 = vmatpush1.msra.mxu0 %v63
    %109 = vmatprep.subr.mxu0 0.0
    %110 = vmatpush1.msra.mxu0 %v64
    %111 = vmatprep.subr.mxu0 0.0
    %112 = vmatpush1.msra.mxu0 %v65
    %113 = vmatprep.subr.mxu0 0.0
    %114 = vmatpush1.msra.mxu0 %v66
    %115 = vmatprep.subr.mxu0 0.0
    %116 = vmatpush1.msra.mxu0 %v67
    %117 = vmatprep.subr.mxu0 0.0
    %118 = vmatpush1.msra.mxu0 %v68
    %119 = vmatprep.subr.mxu0 0.0
    %120 = vmatpush1.msra.mxu0 %v69
    %121 = vmatprep.subr.mxu0 0.0
    %122 = vmatpush1.msra.mxu0 %v70
    %123 = vmatprep.subr.mxu0 0.0
    %124 = vmatpush1.msra.mxu0 %v71
    %125 = vmatprep.subr.mxu0 0.0
    %126 = vmatpush1.msra.mxu0 %v72
    %127 = vmatprep.subr.mxu0 0.0
    %128 = vmatpush1.msra.mxu0 %v73
    %129 = vmatprep.subr.mxu0 0.0
    %130 = vmatpush1.msra.mxu0 %v74
    %131 = vmatprep.subr.mxu0 0.0
    %132 = vmatpush1.msra.mxu0 %v75
    %133 = vmatprep.subr.mxu0 0.0
    %134 = vmatpush1.msra.mxu0 %v76
    %135 = vmatprep.subr.mxu0 0.0
    %136 = vmatpush1.msra.mxu0 %v77
    %137 = vmatprep.subr.mxu0 0.0
    %138 = vmatpush1.msra.mxu0 %v78
    %139 = vmatprep.subr.mxu0 0.0
    %140 = vmatpush1.msra.mxu0 %v79
    %141 = vmatprep.subr.mxu0 0.0
    %142 = vmatpush1.msra.mxu0 %v80
    %143 = vmatprep.subr.mxu0 0.0
    %144 = vmatpush1.msra.mxu0 %v81
    %145 = vmatprep.subr.mxu0 0.0
    %146 = vmatpush1.msra.mxu0 %v82
    %147 = vmatprep.subr.mxu0 0.0
    %148 = vmatpush1.msra.mxu0 %v83
    %149 = vmatprep.subr.mxu0 0.0
    %150 = vmatpush1.msra.mxu0 %v84
    %151 = vmatprep.subr.mxu0 0.0
    %152 = vmatpush1.msra.mxu0 %v85
    %153 = vmatprep.subr.mxu0 0.0
    %154 = vmatpush1.msra.mxu0 %v86
    %155 = vmatprep.subr.mxu0 0.0
    %156 = vmatpush1.msra.mxu0 %v87
    %157 = vmatprep.subr.mxu0 0.0
    %158 = vmatpush1.msra.mxu0 %v88
    %159 = vmatprep.subr.mxu0 0.0
    %160 = vmatpush1.msra.mxu0 %v89
    %161 = vmatprep.mubr.f32.mxu0 %v55
    %162 = vmatmul.mubr.f32.gmra.mrb[0].mxu0 %v54
    %v163 = vpop.f32.mrb[0].mxu0
    %v164 = vadd.f32 %v95, %v163
    %v165 = vpop.f32.mrb[0].mxu0
    %166 = vmatprep.mubr.f32.mxu0 %v57
    %167 = vmatmul.mubr.f32.gmra.mrb[0].mxu0 %v56
    %v168 = vpop.f32.mrb[0].mxu0
    %v169 = vadd.f32 %v95, %v168
    %v170 = vpop.f32.mrb[0].mxu0
    %171 = vdwg.mxu0
    %v172 = vmax.f32 %v164, 0.0
    %v173 = vmax.f32 %v169, 0.0
    %174 = vst [vmem:[#allocation8] sm:$0xff] %v172
    %175 = vst [vmem:[#allocation8 + $0x8] sm:$0xff] %v173
    // Predicated region
    $region26: #{project_head_forward.1} parent=1 // pred_check
      _
    $region27: #{project_head_forward.1} parent=1 // pred_check_branch
      %177 = sbr.rel (0) target = $region29
    $region28: #{project_head_forward.1} parent=1 // pred_region
      %s179 = ssub.s32 256, 256
      %180 = vsyncadd [#allocation4], %s179
      %s181 = sshll.u32 [#allocation8], 4
      %s182 = int_to_ptr.vmem [resolvable:$true] %s181
      %187 = dma.vmem_to_hbm [thread:$0]  %s182, 256, %s3, [#allocation4], 128, 128, 8
    $region29: #{project_head_forward.1} parent=1 // pred_fallthru
      _
    // Predicated region
    $region30: #{project_head_forward.1} parent=1 // pred_check
      _
    $region31: #{project_head_forward.1} parent=1 // pred_check_branch
      %189 = sbr.rel (0) target = $region33
    $region32: #{project_head_forward.1} parent=1 // pred_region
      %190 = dma.done [#allocation4], 256
    $region33: #{project_head_forward.1} parent=1 // pred_fallthru
      _
    %191 = vsyncpa [#allocation3], 1
    %192 = vsyncpa [#allocation6], 1
    %193 = vsyncpa [#allocation4], 1

</llo_original>
